<compile_context>
chip_gen: v7x
topology: tpu7x:2x2x1
jax: 0.10.0
libtpu: 0.0.40
codegen_flags: <defaults>
</compile_context>

<pallas_src>
import functools

import numpy as np
import jax
import jax.numpy as jnp
from jax.experimental import pallas as pl
from jax.experimental.pallas import tpu as pltpu

BITS = 4
GROUP_SIZE = 128
BLOB = GROUP_SIZE // 2          # 64 packed bytes per group (2 weights / byte)
_NIBBLE_MASK = np.uint32(0x0F0F0F0F)


def _quant_matmul_kernel(x_ref, qw_ref, z_ref, s_ref, b_ref, o_ref,
                         acc_ref, w_ref, *, gb):
    """Computes one (tm, tn) output tile; grid axis 2 walks chunks of gb groups."""
    kk = pl.program_id(2)

    # Bias folded into the accumulator init — removes the epilogue RMW pass.
    @pl.when(kk == 0)
    def _():
        acc_ref[...] = jnp.broadcast_to(b_ref[...], acc_ref.shape)

    # ---- dequant: packed-word nibble extraction (no int32/f32 widening) ----
    # qw_ref is (gb*64, tn) uint8; low nibble = k_local in [0,64), high nibble
    # = k_local in [64,128) of each 128-wide group (one-time prep repack).
    q32 = pltpu.bitcast(qw_ref[...], jnp.uint32)                 # (gb*16, tn)
    lo8 = pltpu.bitcast(q32 & _NIBBLE_MASK, jnp.int8)            # (gb*64, tn)
    hi8 = pltpu.bitcast((q32 >> 4) & _NIBBLE_MASK, jnp.int8)     # (gb*64, tn)
    lo = lo8.astype(jnp.bfloat16)                                # 0..15, exact in bf16
    hi = hi8.astype(jnp.bfloat16)

    # (q - z) * s entirely in bf16; write the K-major dequant tile into VMEM
    # scratch so a single fused dot can consume K = gb*128 at once.
    for g in range(gb):            # gb is a small static constant (<= 8)
        zg = z_ref[g]              # (1, tn) bf16 (exact small ints)
        sg = s_ref[g]              # (1, tn) bf16
        a, b = g * BLOB, (g + 1) * BLOB
        r = g * GROUP_SIZE
        w_ref[r:r + BLOB, :] = (lo[a:b] - zg) * sg
        w_ref[r + BLOB:r + GROUP_SIZE, :] = (hi[a:b] - zg) * sg

    # ---- one fused MXU dot over K = gb*128; single accumulator RMW / step ----
    acc_ref[...] += jnp.dot(x_ref[...], w_ref[...],
                            preferred_element_type=jnp.float32)

    @pl.when(kk == pl.num_programs(2) - 1)
    def _():
        o_ref[...] = acc_ref[...].astype(o_ref.dtype)


def _round_up(v, m):
    return -(-v // m) * m


def _tn_candidates(n, cap=2048):
    """Divisors of n that are multiples of 128, descending, capped."""
    for t in range(min(n, cap), 0, -128):
        if n % t == 0:
            yield t


def _vmem_bytes(tm, tn, gb, out_bytes):
    x_t = tm * gb * GROUP_SIZE * 2            # bf16 activation tile
    qw_t = gb * BLOB * tn                     # packed uint8 weight tile
    zs_t = 2 * gb * 16 * tn * 2               # zero/scale tiles (sublane padded)
    b_t = 16 * tn * 4                         # bias tile (sublane padded)
    out_t = tm * tn * out_bytes               # output tile
    acc = tm * tn * 4                         # f32 accumulator scratch
    wscr = gb * GROUP_SIZE * tn * 2           # bf16 dequant tile scratch
    tmp = 10 * gb * BLOB * tn                 # packed-word / int8 / bf16 temporaries
    return 2 * (x_t + qw_t + zs_t + b_t + out_t) + acc + wscr + tmp


def _pick_tiles(M, N, G, out_bytes):
    """Choose (gb, tm, tn, Mp) under a ~20 MiB VMEM budget (v7x-safe)."""
    gb = next(g for g in (8, 4, 2, 1) if G % g == 0)
    tm = 512 if M >= 512 else _round_up(M, 16)        # 16-row pad: bf16 sublane pack
    Mp = _round_up(M, tm)
    tn = next(_tn_candidates(N))
    budget = 20 * 1024 * 1024
    while _vmem_bytes(tm, tn, gb, out_bytes) > budget:
        smaller = [t for t in _tn_candidates(N) if t < tn]
        if smaller:
            tn = smaller[0]
        elif tm > 16:
            tm = max(16, _round_up(tm // 2, 16))
            Mp = _round_up(M, tm)
        elif gb > 1:
            gb = max(g for g in (1, 2, 4) if G % g == 0 and g < gb)
        else:
            break
    # v7x: keep >= 2 blocks on the parallel (i, j) axes whenever the shapes
    # allow, so both TensorCores get work.
    if (Mp // tm) * (N // tn) < 2:
        halves = [t for t in _tn_candidates(N) if N // t >= 2]
        if halves:
            tn = halves[0]
    return gb, tm, tn, Mp


def prepare_quant_params(qweight, scales_flat, qzeros_flat, bias,
                         in_features, out_features):
    """One-time (per-checkpoint) constant preprocessing of the packed buffers.

    Returns (qw_km, zeros, scales, bias2):
      qw_km  : (G*64, N) uint8, K-major repacked nibbles (low nib: k_local<64)
      zeros  : (G, 1, N) bfloat16 (exact small integers)
      scales : (G, 1, N) bfloat16
      bias2  : (1, N) float32
    """
    K, N = in_features, out_features
    assert K % GROUP_SIZE == 0, "kernel assumes K is a multiple of 128"
    assert N % 128 == 0, "kernel assumes N is a multiple of 128"
    G = K // GROUP_SIZE
    Gpad = G + (G & 1)  # ORT pads packed zero-points per row to an even #groups

    # --- weights: unpack (adjacent-k nibble pairing), repack so low nibble =
    #     k_local in [0,64) and high nibble = k_local in [64,128), K-major. ---
    qw = jnp.asarray(qweight).astype(jnp.uint8).reshape(N, G, BLOB)
    nib = jnp.stack([qw & 0xF, (qw >> 4) & 0xF], axis=-1).reshape(N, G, GROUP_SIZE)
    repacked = (nib[..., :BLOB] | (nib[..., BLOB:] << 4)).astype(jnp.uint8)   # (N, G, 64)
    qw_km = jnp.transpose(repacked, (1, 2, 0)).reshape(G * BLOB, N)           # (G*64, N)

    # --- 4-bit packed zero points (low nibble first), handles odd-G padding ---
    qz = jnp.asarray(qzeros_flat).astype(jnp.uint8)
    znib = jnp.stack([qz & 0xF, (qz >> 4) & 0xF], axis=-1).reshape(-1)
    zeros = znib[: N * Gpad].reshape(N, Gpad)[:, :G]                          # (N, G)
    zeros = jnp.transpose(zeros, (1, 0)).astype(jnp.bfloat16).reshape(G, 1, N)

    scales = jnp.transpose(
        jnp.asarray(scales_flat).astype(jnp.float32).reshape(N, G), (1, 0)
    ).astype(jnp.bfloat16).reshape(G, 1, N)

    if bias is None:
        bias2 = jnp.zeros((1, N), jnp.float32)
    else:
        bias2 = jnp.asarray(bias).astype(jnp.float32).reshape(1, N)
    return qw_km, zeros, scales, bias2


def quant_linear_ort_forward(x, qw_km, zeros, scales, bias2,
                             in_features, out_features, g_idx=None,
                             out_dtype=jnp.float32):
    """Pallas equivalent of QuantLinearORT.forward (bits=4, group_size=128)."""
    if g_idx is not None:
        # TODO(synk): act_order / g_idx permutation path not implemented (forward
        # only passes g_idx when pack() set act_order).
        raise NotImplementedError("act_order (g_idx) path is not supported")

    K, N = in_features, out_features
    G = K // GROUP_SIZE

    orig_shape = x.shape
    M = int(np.prod(orig_shape[:-1]))
    x2 = x.reshape(M, K).astype(jnp.bfloat16)   # halve activation DMA; MXU eats bf16

    gb, tm, tn, Mp = _pick_tiles(M, N, G, jnp.dtype(out_dtype).itemsize)
    if Mp != M:
        x2 = jnp.pad(x2, ((0, Mp - M), (0, 0)))
    grid = (Mp // tm, N // tn, G // gb)

    kernel = functools.partial(_quant_matmul_kernel, gb=gb)

    out = pl.pallas_call(
        kernel,
        out_shape=jax.ShapeDtypeStruct((Mp, N), out_dtype),
        grid_spec=pltpu.PrefetchScalarGridSpec(
            num_scalar_prefetch=0,
            grid=grid,
            in_specs=[
                pl.BlockSpec((tm, gb * GROUP_SIZE), lambda i, j, k: (i, k)),   # x (bf16)
                pl.BlockSpec((gb * BLOB, tn), lambda i, j, k: (k, j)),         # packed weights (uint8)
                pl.BlockSpec((gb, 1, tn), lambda i, j, k: (k, 0, j)),          # zero points (bf16)
                pl.BlockSpec((gb, 1, tn), lambda i, j, k: (k, 0, j)),          # scales (bf16)
                pl.BlockSpec((1, tn), lambda i, j, k: (0, j)),                 # bias (f32)
            ],
            out_specs=pl.BlockSpec((tm, tn), lambda i, j, k: (i, j)),
            scratch_shapes=[
                pltpu.VMEM((tm, tn), jnp.float32),              # f32 accumulator
                pltpu.VMEM((gb * GROUP_SIZE, tn), jnp.bfloat16),  # K-major dequant tile
            ],
        ),
        compiler_params=pltpu.CompilerParams(
            dimension_semantics=("parallel", "parallel", "arbitrary")),
    )(x2, qw_km, zeros, scales, bias2)

    out = out[:M]
    return out.reshape(*orig_shape[:-1], N)


def reference_forward(x, qweight, scales_flat, qzeros_flat, bias, K, N):
    """Plain numpy port of dequantize_blockwise_bits + matmul (verification)."""
    G = K // GROUP_SIZE
    Gpad = G + (G & 1)
    qw = np.asarray(qweight).astype(np.int32).reshape(N, G, BLOB)
    nib = np.stack([qw & 15, (qw >> 4) & 15], axis=-1).reshape(N, G, GROUP_SIZE)
    qz = np.asarray(qzeros_flat).astype(np.int32)
    znib = np.stack([qz & 15, (qz >> 4) & 15], axis=-1).reshape(-1)
    zeros = znib[: N * Gpad].reshape(N, Gpad)[:, :G].reshape(N, G, 1)
    s = np.asarray(scales_flat).astype(np.float32).reshape(N, G, 1)
    W = ((nib - zeros) * s).reshape(N, K).astype(np.float32)
    out = np.asarray(x).astype(np.float32).reshape(-1, K) @ W.T
    out = out + np.asarray(bias).astype(np.float32)
    return out.reshape(*x.shape[:-1], N)


if __name__ == "__main__":
    batch, seq = 2, 4
    in_features, out_features = 256, 128            # K, N ; G = 2 groups of 128
    G = in_features // GROUP_SIZE

    key = jax.random.PRNGKey(0)
    k1, k2, k3, k4, k5 = jax.random.split(key, 5)

    # Buffers with the same shapes/dtypes QuantLinearORT.__init__ registers.
    qweight = jax.random.randint(
        k1, (out_features, G, GROUP_SIZE // (8 // BITS)), 0, 256,
        dtype=jnp.int32).astype(jnp.uint8)
    scales_flat = jax.random.uniform(
        k2, (G * out_features,), minval=0.005, maxval=0.02).astype(jnp.float16)
    qzeros_flat = jax.random.randint(
        k3, ((G + (G & 1)) * (out_features // 8 * BITS),), 0, 256,
        dtype=jnp.int32).astype(jnp.uint8)
    bias = (0.01 * jax.random.normal(k4, (out_features,))).astype(jnp.float16)
    x = jax.random.normal(k5, (batch, seq, in_features), dtype=jnp.float32)

    # One-time constant prep (per checkpoint), then the per-call forward.
    qw_km, zeros, scales, bias2 = prepare_quant_params(
        qweight, scales_flat, qzeros_flat, bias, in_features, out_features)
    out = quant_linear_ort_forward(x, qw_km, zeros, scales, bias2,
                                   in_features, out_features)
    out = jax.block_until_ready(out)

    ref = reference_forward(x, qweight, scales_flat, qzeros_flat, bias,
                            in_features, out_features)
    assert out.shape == (batch, seq, out_features)
    # bf16 activations / bf16 dequantized weights into the MXU (f32 accumulation)
    # -> modest tolerance vs the f32 reference.
    np.testing.assert_allclose(np.asarray(out), ref, rtol=3e-2, atol=3e-2)
    print("KERNEL_OK")
</pallas_src>

<mosaic_0001>
module attributes {stable_mosaic.version = 11 : i64} {
  func.func @_quant_matmul_kernel(%arg0: i32, %arg1: i32, %arg2: i32, %arg3: memref<16x256xbf16, #tpu.memory_space<vmem>>, %arg4: memref<128x128xi8, #tpu.memory_space<vmem>>, %arg5: memref<2x1x128xbf16, #tpu.memory_space<vmem>>, %arg6: memref<2x1x128xbf16, #tpu.memory_space<vmem>>, %arg7: memref<1x128xf32, #tpu.memory_space<vmem>>, %arg8: memref<16x128xf32, #tpu.memory_space<vmem>>, %arg9: memref<16x128xf32, #tpu.memory_space<vmem>>, %arg10: memref<256x128xbf16, #tpu.memory_space<vmem>>) attributes {dimension_semantics = [#tpu.dimension_semantics<parallel>, #tpu.dimension_semantics<parallel>, #tpu.dimension_semantics<arbitrary>], iteration_bounds = array<i64: 1, 1, 1>, scalar_prefetch = 0 : i64, scratch_operands = 2 : i64, tpu.core_type = #tpu.core_type<tc>, window_params = [{transform_indices = @transform_0, window_bounds = array<i64: 16, 256>}, {transform_indices = @transform_1, window_bounds = array<i64: 128, 128>}, {transform_indices = @transform_2, window_bounds = array<i64: 2, 1, 128>}, {transform_indices = @transform_3, window_bounds = array<i64: 2, 1, 128>}, {transform_indices = @transform_4, window_bounds = array<i64: 1, 128>}, {transform_indices = @transform_5, window_bounds = array<i64: 16, 128>}]} {
    %c0_i32 = arith.constant 0 : i32
    %0 = arith.cmpi eq, %arg2, %c0_i32 : i32
    %1 = arith.extui %0 : i1 to i32
    %c0_i32_0 = arith.constant 0 : i32
    %2 = arith.cmpi ne, %1, %c0_i32_0 : i32
    scf.if %2 {
      %c0_29 = arith.constant 0 : index
      %c0_30 = arith.constant 0 : index
      %56 = vector.load %arg7[%c0_29, %c0_30] : memref<1x128xf32, #tpu.memory_space<vmem>>, vector<1x128xf32>
      %57 = vector.shape_cast %56 : vector<1x128xf32> to vector<1x128xf32>
      %58 = vector.broadcast %57 : vector<1x128xf32> to vector<16x128xf32>
      %c0_31 = arith.constant 0 : index
      %c0_32 = arith.constant 0 : index
      %59 = vector.load %arg9[%c0_31, %c0_32] : memref<16x128xf32, #tpu.memory_space<vmem>>, vector<16x128xf32>
      tpu.vector_store %arg9[%c0_31, %c0_32], %58 {strides = array<i32>} : memref<16x128xf32, #tpu.memory_space<vmem>>, vector<16x128xf32>,
    } else {
    }
    %c0 = arith.constant 0 : index
    %c0_1 = arith.constant 0 : index
    %3 = vector.load %arg4[%c0, %c0_1] : memref<128x128xi8, #tpu.memory_space<vmem>>, vector<128x128xi8>
    %4 = tpu.bitcast %3 : vector<128x128xi8> -> vector<32x128xi32>
    %c252645135_i32 = arith.constant 252645135 : i32
    %5 = vector.broadcast %c252645135_i32 : i32 to vector<32x128xi32>
    %6 = arith.andi %4, %5 : vector<32x128xi32>
    %7 = tpu.bitcast %6 : vector<32x128xi32> -> vector<128x128xi8>
    %c4_i32 = arith.constant 4 : i32
    %8 = vector.broadcast %c4_i32 : i32 to vector<32x128xi32>
    %9 = arith.shrui %4, %8 : vector<32x128xi32>
    %c252645135_i32_2 = arith.constant 252645135 : i32
    %10 = vector.broadcast %c252645135_i32_2 : i32 to vector<32x128xi32>
    %11 = arith.andi %9, %10 : vector<32x128xi32>
    %12 = tpu.bitcast %11 : vector<32x128xi32> -> vector<128x128xi8>
    %13 = arith.sitofp %7 : vector<128x128xi8> to vector<128x128xbf16>
    %14 = arith.sitofp %12 : vector<128x128xi8> to vector<128x128xbf16>
    %c0_3 = arith.constant 0 : index
    %c0_4 = arith.constant 0 : index
    %c0_5 = arith.constant 0 : index
    %15 = vector.load %arg5[%c0_3, %c0_4, %c0_5] : memref<2x1x128xbf16, #tpu.memory_space<vmem>>, vector<1x1x128xbf16>
    %16 = vector.shape_cast %15 : vector<1x1x128xbf16> to vector<1x128xbf16>
    %c0_6 = arith.constant 0 : index
    %c0_7 = arith.constant 0 : index
    %c0_8 = arith.constant 0 : index
    %17 = vector.load %arg6[%c0_6, %c0_7, %c0_8] : memref<2x1x128xbf16, #tpu.memory_space<vmem>>, vector<1x1x128xbf16>
    %18 = vector.shape_cast %17 : vector<1x1x128xbf16> to vector<1x128xbf16>
    %19 = vector.extract_strided_slice %13 {offsets = [0, 0], sizes = [64, 128], strides = [1, 1]} : vector<128x128xbf16> to vector<64x128xbf16>
    %20 = vector.broadcast %16 : vector<1x128xbf16> to vector<64x128xbf16>
    %21 = arith.subf %19, %20 : vector<64x128xbf16>
    %22 = vector.broadcast %18 : vector<1x128xbf16> to vector<64x128xbf16>
    %23 = arith.mulf %21, %22 : vector<64x128xbf16>
    %c0_9 = arith.constant 0 : index
    %c0_10 = arith.constant 0 : index
    %24 = vector.load %arg10[%c0_9, %c0_10] : memref<256x128xbf16, #tpu.memory_space<vmem>>, vector<64x128xbf16>
    tpu.vector_store %arg10[%c0_9, %c0_10], %23 {strides = array<i32>} : memref<256x128xbf16, #tpu.memory_space<vmem>>, vector<64x128xbf16>,
    %25 = vector.extract_strided_slice %14 {offsets = [0, 0], sizes = [64, 128], strides = [1, 1]} : vector<128x128xbf16> to vector<64x128xbf16>
    %26 = vector.broadcast %16 : vector<1x128xbf16> to vector<64x128xbf16>
    %27 = arith.subf %25, %26 : vector<64x128xbf16>
    %28 = vector.broadcast %18 : vector<1x128xbf16> to vector<64x128xbf16>
    %29 = arith.mulf %27, %28 : vector<64x128xbf16>
    %c64 = arith.constant 64 : index
    %c0_11 = arith.constant 0 : index
    %30 = vector.load %arg10[%c64, %c0_11] : memref<256x128xbf16, #tpu.memory_space<vmem>>, vector<64x128xbf16>
    tpu.vector_store %arg10[%c64, %c0_11], %29 {strides = array<i32>} : memref<256x128xbf16, #tpu.memory_space<vmem>>, vector<64x128xbf16>,
    %c1 = arith.constant 1 : index
    %c0_12 = arith.constant 0 : index
    %c0_13 = arith.constant 0 : index
    %31 = vector.load %arg5[%c1, %c0_12, %c0_13] : memref<2x1x128xbf16, #tpu.memory_space<vmem>>, vector<1x1x128xbf16>
    %32 = vector.shape_cast %31 : vector<1x1x128xbf16> to vector<1x128xbf16>
    %c1_14 = arith.constant 1 : index
    %c0_15 = arith.constant 0 : index
    %c0_16 = arith.constant 0 : index
    %33 = vector.load %arg6[%c1_14, %c0_15, %c0_16] : memref<2x1x128xbf16, #tpu.memory_space<vmem>>, vector<1x1x128xbf16>
    %34 = vector.shape_cast %33 : vector<1x1x128xbf16> to vector<1x128xbf16>
    %35 = vector.extract_strided_slice %13 {offsets = [64, 0], sizes = [64, 128], strides = [1, 1]} : vector<128x128xbf16> to vector<64x128xbf16>
    %36 = vector.broadcast %32 : vector<1x128xbf16> to vector<64x128xbf16>
    %37 = arith.subf %35, %36 : vector<64x128xbf16>
    %38 = vector.broadcast %34 : vector<1x128xbf16> to vector<64x128xbf16>
    %39 = arith.mulf %37, %38 : vector<64x128xbf16>
    %c128 = arith.constant 128 : index
    %c0_17 = arith.constant 0 : index
    %40 = vector.load %arg10[%c128, %c0_17] : memref<256x128xbf16, #tpu.memory_space<vmem>>, vector<64x128xbf16>
    tpu.vector_store %arg10[%c128, %c0_17], %39 {strides = array<i32>} : memref<256x128xbf16, #tpu.memory_space<vmem>>, vector<64x128xbf16>,
    %41 = vector.extract_strided_slice %14 {offsets = [64, 0], sizes = [64, 128], strides = [1, 1]} : vector<128x128xbf16> to vector<64x128xbf16>
    %42 = vector.broadcast %32 : vector<1x128xbf16> to vector<64x128xbf16>
    %43 = arith.subf %41, %42 : vector<64x128xbf16>
    %44 = vector.broadcast %34 : vector<1x128xbf16> to vector<64x128xbf16>
    %45 = arith.mulf %43, %44 : vector<64x128xbf16>
    %c192 = arith.constant 192 : index
    %c0_18 = arith.constant 0 : index
    %46 = vector.load %arg10[%c192, %c0_18] : memref<256x128xbf16, #tpu.memory_space<vmem>>, vector<64x128xbf16>
    tpu.vector_store %arg10[%c192, %c0_18], %45 {strides = array<i32>} : memref<256x128xbf16, #tpu.memory_space<vmem>>, vector<64x128xbf16>,
    %c0_19 = arith.constant 0 : index
    %c0_20 = arith.constant 0 : index
    %47 = vector.load %arg9[%c0_19, %c0_20] : memref<16x128xf32, #tpu.memory_space<vmem>>, vector<16x128xf32>
    %c0_21 = arith.constant 0 : index
    %c0_22 = arith.constant 0 : index
    %48 = vector.load %arg3[%c0_21, %c0_22] : memref<16x256xbf16, #tpu.memory_space<vmem>>, vector<16x256xbf16>
    %c0_23 = arith.constant 0 : index
    %c0_24 = arith.constant 0 : index
    %49 = vector.load %arg10[%c0_23, %c0_24] : memref<256x128xbf16, #tpu.memory_space<vmem>>, vector<256x128xbf16>
    %cst = arith.constant dense<0.000000e+00> : vector<16x128xf32>
    %50 = tpu.matmul %48, %49, %cst {dimension_numbers = #tpu.dot_dimension_numbers<[1], [0], [0], [1], [0, 0, 1, 1], [], []>} : vector<16x256xbf16>, vector<256x128xbf16>, vector<16x128xf32> -> vector<16x128xf32>
    %51 = arith.addf %47, %50 : vector<16x128xf32>
    %c0_25 = arith.constant 0 : index
    %c0_26 = arith.constant 0 : index
    %52 = vector.load %arg9[%c0_25, %c0_26] : memref<16x128xf32, #tpu.memory_space<vmem>>, vector<16x128xf32>
    tpu.vector_store %arg9[%c0_25, %c0_26], %51 {strides = array<i32>} : memref<16x128xf32, #tpu.memory_space<vmem>>, vector<16x128xf32>,
    %c0_i32_27 = arith.constant 0 : i32
    %53 = arith.cmpi eq, %arg2, %c0_i32_27 : i32
    %54 = arith.extui %53 : i1 to i32
    %c0_i32_28 = arith.constant 0 : i32
    %55 = arith.cmpi ne, %54, %c0_i32_28 : i32
    scf.if %55 {
      %c0_29 = arith.constant 0 : index
      %c0_30 = arith.constant 0 : index
      %56 = vector.load %arg9[%c0_29, %c0_30] : memref<16x128xf32, #tpu.memory_space<vmem>>, vector<16x128xf32>
      %c0_31 = arith.constant 0 : index
      %c0_32 = arith.constant 0 : index
      %57 = vector.load %arg8[%c0_31, %c0_32] : memref<16x128xf32, #tpu.memory_space<vmem>>, vector<16x128xf32>
      tpu.vector_store %arg8[%c0_31, %c0_32], %56 {strides = array<i32>} : memref<16x128xf32, #tpu.memory_space<vmem>>, vector<16x128xf32>,
    } else {
    }
    return
  }
  func.func @transform_0(%arg0: i32, %arg1: i32, %arg2: i32) -> (i32, i32) {
    %c0_i32 = arith.constant 0 : i32
    return %arg0, %arg2 : i32, i32
  }
  func.func @transform_1(%arg0: i32, %arg1: i32, %arg2: i32) -> (i32, i32) {
    %c0_i32 = arith.constant 0 : i32
    return %arg2, %arg1 : i32, i32
  }
  func.func @transform_2(%arg0: i32, %arg1: i32, %arg2: i32) -> (i32, i32, i32) {
    %c0_i32 = arith.constant 0 : i32
    %c0_i32_0 = arith.constant 0 : i32
    return %arg2, %c0_i32, %arg1 : i32, i32, i32
  }
  func.func @transform_3(%arg0: i32, %arg1: i32, %arg2: i32) -> (i32, i32, i32) {
    %c0_i32 = arith.constant 0 : i32
    %c0_i32_0 = arith.constant 0 : i32
    return %arg2, %c0_i32, %arg1 : i32, i32, i32
  }
  func.func @transform_4(%arg0: i32, %arg1: i32, %arg2: i32) -> (i32, i32) {
    %c0_i32 = arith.constant 0 : i32
    %c0_i32_0 = arith.constant 0 : i32
    return %c0_i32, %arg1 : i32, i32
  }
  func.func @transform_5(%arg0: i32, %arg1: i32, %arg2: i32) -> (i32, i32) {
    %c0_i32 = arith.constant 0 : i32
    return %arg0, %arg1 : i32, i32
  }
}

</mosaic_0001>

<llo_original>
// kernel: tpu_custom_call.1
$region0: #{tpu_custom_call.1}
  #allocation0 [shape = 'u32[]', space=smem, size = 0x4, offset = 0x4, fixed_abs, tag = 'smem constant byte address 0x4 - core index']
  #allocation1 [shape = 'u32[144,128]{1,0:T(1,128)}', space=vmem, size = 0x12000, scoped, tag = 'internal scratch']
  #allocation2 [shape = 'f32[16,128]{1,0:T(8,128)}', space=vmem, size = 0x2000, scoped, tag = 'scratch operand']
  #allocation3 [shape = 'bf16[256,128]{1,0:T(16,128)(2,1)}', space=vmem, size = 0x10000, scoped, tag = 'scratch operand']
  %s0 = inlined_call_operand.hbm [shape: bf16[16,256], index: 0, kind: input, shape index: {}]
  %s1 = inlined_call_operand.hbm [shape: u8[128,128], index: 1, kind: input, shape index: {}]
  %s2 = inlined_call_operand.vmem [shape: bf16[2,1,128], index: 2, kind: input, shape index: {}]
  %s3 = inlined_call_operand.vmem [shape: bf16[2,1,128], index: 3, kind: input, shape index: {}]
  %s4 = inlined_call_operand.vmem [shape: f32[1,128], index: 4, kind: input, shape index: {}]
  %s5 = inlined_call_operand.hbm [shape: f32[16,128], index: 5, kind: output, shape index: {}]
  %s6 = sld [smem:[#allocation0]]
  $region46: #{tpu_custom_call.1} parent=0
    _
  %s8 = ssub.s32 1, %s6
  %s9 = scalar_select 0, %s8, %s6
  $region1: #{tpu_custom_call.1} parent=0
    #allocation4 [shape = 'u8[8192]{0}', space=vmem, size = 0x2000, scoped, tag = 'input window, operand 0, single buffered']
    #allocation5 [shape = 's32[1]{0}', space=sflag, size = 0x4, scoped, tag = 'scoped memory for tpu_custom_call.1']
    #allocation6 [shape = 's32[1]{0}', space=sflag, size = 0x4, scoped, tag = 'scoped memory for tpu_custom_call.1']
    #allocation7 [shape = 'u8[16384]{0}', space=vmem, size = 0x4000, scoped, tag = 'input window, operand 1, single buffered']
    #allocation8 [shape = 's32[1]{0}', space=sflag, size = 0x4, scoped, tag = 'scoped memory for tpu_custom_call.1']
    #allocation9 [shape = 'u8[8192]{0}', space=vmem, size = 0x2000, scoped, tag = 'output window, operand 0, single buffered']
    %10 = vsyncpa [#allocation5], 0
    %11 = vsyncpa [#allocation8], 0
    %12 = vsyncpa [#allocation6], 0
    // Predicated region
    $region2: #{tpu_custom_call.1} parent=1 // pred_check
      _
    $region3: #{tpu_custom_call.1} parent=1 // pred_check_branch
      %14 = sbr.rel (0) target = $region5
    $region4: #{tpu_custom_call.1} parent=1 // pred_region
      %s16 = ssub.s32 256, 256
      %17 = vsyncadd [#allocation5], %s16
      %s18 = sshll.u32 [#allocation4], 4
      %s19 = int_to_ptr.vmem [resolvable:$true] %s18
      %24 = dma.hbm_to_vmem [thread:$0]  %s0, 256, %s19, [#allocation5], 128, 128, 8
    $region5: #{tpu_custom_call.1} parent=1 // pred_fallthru
      _
    // Predicated region
    $region6: #{tpu_custom_call.1} parent=1 // pred_check
      _
    $region7: #{tpu_custom_call.1} parent=1 // pred_check_branch
      %26 = sbr.rel (0) target = $region9
    $region8: #{tpu_custom_call.1} parent=1 // pred_region
      %s28 = ssub.s32 512, 512
      %29 = vsyncadd [#allocation8], %s28
      %s30 = sshll.u32 [#allocation7], 4
      %s31 = int_to_ptr.vmem [resolvable:$true] %s30
      %36 = dma.hbm_to_vmem [thread:$0]  %s1, 512, %s31, [#allocation8], 128, 128, 8
    $region9: #{tpu_custom_call.1} parent=1 // pred_fallthru
      _
    // Predicated region
    $region10: #{tpu_custom_call.1} parent=1 // pred_check
      _
    $region11: #{tpu_custom_call.1} parent=1 // pred_check_branch
      %38 = sbr.rel (0) target = $region13
    $region12: #{tpu_custom_call.1} parent=1 // pred_region
      _
    $region13: #{tpu_custom_call.1} parent=1 // pred_fallthru
      _
    // Predicated region
    $region14: #{tpu_custom_call.1} parent=1 // pred_check
      _
    $region15: #{tpu_custom_call.1} parent=1 // pred_check_branch
      %40 = sbr.rel (0) target = $region17
    $region16: #{tpu_custom_call.1} parent=1 // pred_region
      _
    $region17: #{tpu_custom_call.1} parent=1 // pred_fallthru
      _
    // Predicated region
    $region18: #{tpu_custom_call.1} parent=1 // pred_check
      _
    $region19: #{tpu_custom_call.1} parent=1 // pred_check_branch
      %42 = sbr.rel (0) target = $region21
    $region20: #{tpu_custom_call.1} parent=1 // pred_region
      _
    $region21: #{tpu_custom_call.1} parent=1 // pred_fallthru
      _
    // Predicated region
    $region22: #{tpu_custom_call.1} parent=1 // pred_check
      _
    $region23: #{tpu_custom_call.1} parent=1 // pred_check_branch
      %44 = sbr.rel (0) target = $region25
    $region24: #{tpu_custom_call.1} parent=1 // pred_region
      %45 = dma.done [#allocation5], 256
    $region25: #{tpu_custom_call.1} parent=1 // pred_fallthru
      _
    // Predicated region
    $region26: #{tpu_custom_call.1} parent=1 // pred_check
      _
    $region27: #{tpu_custom_call.1} parent=1 // pred_check_branch
      %47 = sbr.rel (0) target = $region29
    $region28: #{tpu_custom_call.1} parent=1 // pred_region
      %48 = dma.done [#allocation8], 512
    $region29: #{tpu_custom_call.1} parent=1 // pred_fallthru
      _
    %p50 = scmp.eq.s32.totalorder 0, 0
    // Predicated region
    $region30: #{tpu_custom_call.1} parent=1 // pred_check
      %p51 = pneg %p50
    $region31: #{tpu_custom_call.1} parent=1 // pred_check_branch
      %53 = sbr.rel (%p51) target = $region33
    $region32: #{tpu_custom_call.1} parent=1 // pred_region
      %v54 = vld [vmem:[%s4] sm:$0x1]
      %v56 = vlaneseq
      %v57 = vshrl.u32 %v56, 7
      %v58 = vsub.s32 0, %v57
      %v59 = vrot.slane %v54, %v58
      %61 = vst [vmem:[#allocation2] sm:$0xff] %v59
      %62 = vst [vmem:[#allocation2 + $0x8] sm:$0xff] %v59
    $region33: #{tpu_custom_call.1} parent=1 // pred_fallthru
      _
    %v63 = vld [vmem:[#allocation7] sm:$0xff]
    %v64 = vld [vmem:[#allocation7 + $0x8] sm:$0xff]
    %v65 = vld [vmem:[#allocation7 + $0x10] sm:$0xff]
    %v66 = vld [vmem:[#allocation7 + $0x18] sm:$0xff]
    %v71 = vand.u32 %v63, 252645135
    %v72 = vand.u32 %v64, 252645135
    %v73 = vand.u32 %v65, 252645135
    %v74 = vand.u32 %v66, 252645135
    %v79 = vshrl.u32 %v63, 4
    %v80 = vshrl.u32 %v64, 4
    %v81 = vshrl.u32 %v65, 4
    %v82 = vshrl.u32 %v66, 4
    %v83 = vand.u32 %v79, 252645135
    %v84 = vand.u32 %v80, 252645135
    %v85 = vand.u32 %v81, 252645135
    %v86 = vand.u32 %v82, 252645135
    %v91 = vunpack.c.l.s8.bf16 %v71
    %v92 = vunpack.c.h.s8.bf16 %v71
    %v93 = vunpack.c.l.s8.bf16 %v72
    %v94 = vunpack.c.h.s8.bf16 %v72
    %v95 = vunpack.c.l.s8.bf16 %v73
    %v96 = vunpack.c.h.s8.bf16 %v73
    %v97 = vunpack.c.l.s8.bf16 %v74
    %v98 = vunpack.c.h.s8.bf16 %v74
    %v99 = vunpack.c.l.s8.bf16 %v83
    %v100 = vunpack.c.h.s8.bf16 %v83
    %v101 = vunpack.c.l.s8.bf16 %v84
    %v102 = vunpack.c.h.s8.bf16 %v84
    %v103 = vunpack.c.l.s8.bf16 %v85
    %v104 = vunpack.c.h.s8.bf16 %v85
    %v105 = vunpack.c.l.s8.bf16 %v86
    %v106 = vunpack.c.h.s8.bf16 %v86
    %v107 = vld [vmem:[%s2] sm:$0x1]
    %v108 = vld [vmem:[%s3] sm:$0x1]
    %v110 = vpack.i.b16 %v107, %v107
    %v112 = vlaneseq
    %v113 = vshrl.u32 %v112, 7
    %v114 = vsub.s32 0, %v113
    %v115 = vrot.slane %v110, %v114
    %v116 = vsub.bf16 %v91, %v115
    %v117 = vsub.bf16 %v92, %v115
    %v118 = vsub.bf16 %v93, %v115
    %v119 = vsub.bf16 %v94, %v115
    %v121 = vpack.i.b16 %v108, %v108
    %v123 = vlaneseq
    %v124 = vshrl.u32 %v123, 7
    %v125 = vsub.s32 0, %v124
    %v126 = vrot.slane %v121, %v125
    %v127 = vmul.bf16 %v116, %v126
    %v128 = vmul.bf16 %v117, %v126
    %v129 = vmul.bf16 %v118, %v126
    %v130 = vmul.bf16 %v119, %v126
    %131 = vst [vmem:[#allocation3] sm:$0xff] %v127
    %132 = vst [vmem:[#allocation3 + $0x8] sm:$0xff] %v128
    %133 = vst [vmem:[#allocation3 + $0x10] sm:$0xff] %v129
    %134 = vst [vmem:[#allocation3 + $0x18] sm:$0xff] %v130
    %v135 = vsub.bf16 %v99, %v115
    %v136 = vsub.bf16 %v100, %v115
    %v137 = vsub.bf16 %v101, %v115
    %v138 = vsub.bf16 %v102, %v115
    %v139 = vmul.bf16 %v135, %v126
    %v140 = vmul.bf16 %v136, %v126
    %v141 = vmul.bf16 %v137, %v126
    %v142 = vmul.bf16 %v138, %v126
    %143 = vst [vmem:[#allocation3 + $0x20] sm:$0xff] %v139
    %144 = vst [vmem:[#allocation3 + $0x28] sm:$0xff] %v140
    %145 = vst [vmem:[#allocation3 + $0x30] sm:$0xff] %v141
    %146 = vst [vmem:[#allocation3 + $0x38] sm:$0xff] %v142
    %s147 = scalar_lea.vmem %s2, 1
    %v148 = vld [vmem:[%s147] sm:$0x1]
    %s149 = scalar_lea.vmem %s3, 1
    %v150 = vld [vmem:[%s149] sm:$0x1]
    %v152 = vpack.i.b16 %v148, %v148
    %v154 = vlaneseq
    %v155 = vshrl.u32 %v154, 7
    %v156 = vsub.s32 0, %v155
    %v157 = vrot.slane %v152, %v156
    %v158 = vsub.bf16 %v95, %v157
    %v159 = vsub.bf16 %v96, %v157
    %v160 = vsub.bf16 %v97, %v157
    %v161 = vsub.bf16 %v98, %v157
    %v163 = vpack.i.b16 %v150, %v150
    %v165 = vlaneseq
    %v166 = vshrl.u32 %v165, 7
    %v167 = vsub.s32 0, %v166
    %v168 = vrot.slane %v163, %v167
    %v169 = vmul.bf16 %v158, %v168
    %v170 = vmul.bf16 %v159, %v168
    %v171 = vmul.bf16 %v160, %v168
    %v172 = vmul.bf16 %v161, %v168
    %173 = vst [vmem:[#allocation3 + $0x40] sm:$0xff] %v169
    %174 = vst [vmem:[#allocation3 + $0x48] sm:$0xff] %v170
    %175 = vst [vmem:[#allocation3 + $0x50] sm:$0xff] %v171
    %176 = vst [vmem:[#allocation3 + $0x58] sm:$0xff] %v172
    %v177 = vsub.bf16 %v103, %v157
    %v178 = vsub.bf16 %v104, %v157
    %v179 = vsub.bf16 %v105, %v157
    %v180 = vsub.bf16 %v106, %v157
    %v181 = vmul.bf16 %v177, %v168
    %v182 = vmul.bf16 %v178, %v168
    %v183 = vmul.bf16 %v179, %v168
    %v184 = vmul.bf16 %v180, %v168
    %185 = vst [vmem:[#allocation3 + $0x60] sm:$0xff] %v181
    %186 = vst [vmem:[#allocation3 + $0x68] sm:$0xff] %v182
    %187 = vst [vmem:[#allocation3 + $0x70] sm:$0xff] %v183
    %188 = vst [vmem:[#allocation3 + $0x78] sm:$0xff] %v184
    %v189 = vld [vmem:[#allocation2] sm:$0xff]
    %v190 = vld [vmem:[#allocation2 + $0x8] sm:$0xff]
    %v191 = vld [vmem:[#allocation4] sm:$0xff]
    %v192 = vld [vmem:[#allocation4 + $0x8] sm:$0xff]
    %v193 = vld [vmem:[#allocation3] sm:$0xff]
    %v194 = vld [vmem:[#allocation3 + $0x8] sm:$0xff]
    %v195 = vld [vmem:[#allocation3 + $0x10] sm:$0xff]
    %v196 = vld [vmem:[#allocation3 + $0x18] sm:$0xff]
    %v197 = vld [vmem:[#allocation3 + $0x20] sm:$0xff]
    %v198 = vld [vmem:[#allocation3 + $0x28] sm:$0xff]
    %v199 = vld [vmem:[#allocation3 + $0x30] sm:$0xff]
    %v200 = vld [vmem:[#allocation3 + $0x38] sm:$0xff]
    %v201 = vld [vmem:[#allocation3 + $0x40] sm:$0xff]
    %v202 = vld [vmem:[#allocation3 + $0x48] sm:$0xff]
    %v203 = vld [vmem:[#allocation3 + $0x50] sm:$0xff]
    %v204 = vld [vmem:[#allocation3 + $0x58] sm:$0xff]
    %v205 = vld [vmem:[#allocation3 + $0x60] sm:$0xff]
    %v206 = vld [vmem:[#allocation3 + $0x68] sm:$0xff]
    %v207 = vld [vmem:[#allocation3 + $0x70] sm:$0xff]
    %v208 = vld [vmem:[#allocation3 + $0x78] sm:$0xff]
    %v211 = vunpack.c.l.b16 %v191
    %v212 = vunpack.c.h.b16 %v191
    %v213 = vunpack.c.l.b16 %v192
    %v214 = vunpack.c.h.b16 %v192
    %v215 = vpack.c.b16 %v213, %v211
    %v216 = vpack.c.b16 %v214, %v212
    %219 = vmatprep.subr.bf16.mxu0 0
    %220 = vmatpush1.bf16.msra.mxu0 %v193
    %221 = vmatprep.subr.bf16.mxu0 0
    %222 = vmatpush1.bf16.msra.mxu0 %v194
    %223 = vmatprep.subr.bf16.mxu0 0
    %224 = vmatpush1.bf16.msra.mxu0 %v195
    %225 = vmatprep.subr.bf16.mxu0 0
    %226 = vmatpush1.bf16.msra.mxu0 %v196
    %227 = vmatprep.subr.bf16.mxu0 0
    %228 = vmatpush1.bf16.msra.mxu0 %v197
    %229 = vmatprep.subr.bf16.mxu0 0
    %230 = vmatpush1.bf16.msra.mxu0 %v198
    %231 = vmatprep.subr.bf16.mxu0 0
    %232 = vmatpush1.bf16.msra.mxu0 %v199
    %233 = vmatprep.subr.bf16.mxu0 0
    %234 = vmatpush1.bf16.msra.mxu0 %v200
    %235 = vmatprep.subr.bf16.mxu0 0
    %236 = vmatpush1.bf16.msra.mxu0 %v201
    %237 = vmatprep.subr.bf16.mxu0 0
    %238 = vmatpush1.bf16.msra.mxu0 %v202
    %239 = vmatprep.subr.bf16.mxu0 0
    %240 = vmatpush1.bf16.msra.mxu0 %v203
    %241 = vmatprep.subr.bf16.mxu0 0
    %242 = vmatpush1.bf16.msra.mxu0 %v204
    %243 = vmatprep.subr.bf16.mxu0 0
    %244 = vmatpush1.bf16.msra.mxu0 %v205
    %245 = vmatprep.subr.bf16.mxu0 0
    %246 = vmatpush1.bf16.msra.mxu0 %v206
    %247 = vmatprep.subr.bf16.mxu0 0
    %248 = vmatpush1.bf16.msra.mxu0 %v207
    %249 = vmatprep.subr.bf16.mxu0 0
    %250 = vmatpush1.bf16.msra.mxu0 %v208
    %251 = vmatprep.mubr.bf16.mxu0 %v216
    %252 = vmatmul.mubr.bf16.gmra.mrb[0].mxu0 %v215
    %v253 = vpop.f32.mrb[0].mxu0
    %v254 = vadd.f32 0.0, %v253
    %v255 = vpop.f32.mrb[0].mxu0
    %v256 = vpop.f32.mrb[0].mxu0
    %v257 = vadd.f32 0.0, %v256
    %v258 = vpop.f32.mrb[0].mxu0
    %259 = vdwg.mxu0
    %v260 = vadd.f32 %v189, %v254
    %v261 = vadd.f32 %v190, %v257
    %262 = vst [vmem:[#allocation2] sm:$0xff] %v260
    %263 = vst [vmem:[#allocation2 + $0x8] sm:$0xff] %v261
    // Predicated region
    $region34: #{tpu_custom_call.1} parent=1 // pred_check
      %p264 = pneg %p50
    $region35: #{tpu_custom_call.1} parent=1 // pred_check_branch
      %266 = sbr.rel (%p264) target = $region37
    $region36: #{tpu_custom_call.1} parent=1 // pred_region
      %v267 = vld [vmem:[#allocation2] sm:$0xff]
      %v268 = vld [vmem:[#allocation2 + $0x8] sm:$0xff]
      %269 = vst [vmem:[#allocation9] sm:$0xff] %v267
      %270 = vst [vmem:[#allocation9 + $0x8] sm:$0xff] %v268
    $region37: #{tpu_custom_call.1} parent=1 // pred_fallthru
      _
    // Predicated region
    $region38: #{tpu_custom_call.1} parent=1 // pred_check
      _
    $region39: #{tpu_custom_call.1} parent=1 // pred_check_branch
      %272 = sbr.rel (0) target = $region41
    $region40: #{tpu_custom_call.1} parent=1 // pred_region
      %s274 = ssub.s32 256, 256
      %275 = vsyncadd [#allocation6], %s274
      %s276 = sshll.u32 [#allocation9], 4
      %s277 = int_to_ptr.vmem [resolvable:$true] %s276
      %282 = dma.vmem_to_hbm [thread:$0]  %s277, 256, %s5, [#allocation6], 128, 128, 8
    $region41: #{tpu_custom_call.1} parent=1 // pred_fallthru
      _
    // Predicated region
    $region42: #{tpu_custom_call.1} parent=1 // pred_check
      _
    $region43: #{tpu_custom_call.1} parent=1 // pred_check_branch
      %284 = sbr.rel (0) target = $region45
    $region44: #{tpu_custom_call.1} parent=1 // pred_region
      %285 = dma.done [#allocation6], 256
    $region45: #{tpu_custom_call.1} parent=1 // pred_fallthru
      _
    %286 = vsyncpa [#allocation5], 1
    %287 = vsyncpa [#allocation8], 1
    %288 = vsyncpa [#allocation6], 1

</llo_original>
